<compile_context>
chip_gen: v6e
topology: v6e:2x2x1
jax: 0.10.0
libtpu: 0.0.40
codegen_flags: <defaults>
</compile_context>

<pallas_src>
import jax
import jax.numpy as jnp
from jax.experimental import pallas as pl
from jax.experimental.pallas import tpu as pltpu


def _round_up(x, m):
    return (x + m - 1) // m * m


def _device_config():
    """Per-chip (tm, ti, vmem_limit, num_tc) defaults from the roofline."""
    try:
        kind = jax.devices()[0].device_kind.lower()
    except Exception:  # pragma: no cover - defensive
        kind = ""
    if "v5" in kind:
        return dict(tm=256, ti=1024, vmem=100 * 1024 * 1024, num_tc=1)
    if "v6" in kind:
        return dict(tm=1024, ti=512, vmem=110 * 1024 * 1024, num_tc=1)
    if "v7" in kind:
        return dict(tm=512, ti=256, vmem=52 * 1024 * 1024, num_tc=2)
    # Unknown / fallback: conservative.
    return dict(tm=512, ti=512, vmem=64 * 1024 * 1024, num_tc=1)


def _vmem_estimate(tm, ti, H, x_bytes, out_bytes, w_bytes):
    """Rough double-buffered VMEM working-set estimate (bytes)."""
    act = 2 * tm * H * (x_bytes + out_bytes)       # x + out blocks (double-buffered)
    acc = tm * H * 4                               # f32 accumulator scratch
    wgt = 2 * (2 * ti + ti) * H * w_bytes          # wgu + wd blocks (double-buffered)
    inter = tm * 2 * ti * 4 + tm * ti * 4          # f32 gu / h intermediates
    return act + acc + wgt + inter


def _mlp_kernel(x_ref, wgu_ref, wd_ref, o_ref, acc_ref):
    # x_ref:   (tm, H)        token tile (any float dtype; cast in-kernel)
    # wgu_ref: (H, 2*ti)      fused [gate | up] weight tile (transposed, bf16)
    # wd_ref:  (ti, H)        down_proj weight tile (transposed, bf16)
    # o_ref:   (tm, H)        output tile
    # acc_ref: (tm, H)        f32 accumulator, persistent across the I axis
    j = pl.program_id(1)

    @pl.when(j == 0)
    def _init():
        acc_ref[...] = jnp.zeros_like(acc_ref)

    ti = wd_ref.shape[0]
    cdt = wd_ref.dtype
    x = x_ref[...].astype(cdt)                                 # in-kernel cast
    # Single fused matmul for gate_proj and up_proj on this I-tile.
    gu = jnp.dot(x, wgu_ref[...], preferred_element_type=jnp.float32)  # (tm, 2*ti)
    g = gu[:, :ti]                                             # lane-tile aligned views
    u = gu[:, ti:]
    # SiLU in f32 (EUP sigmoid hidden under the MXU work).
    h = (g * jax.nn.sigmoid(g)) * u                            # (tm, ti) f32
    acc_ref[...] += jnp.dot(h.astype(cdt), wd_ref[...],
                            preferred_element_type=jnp.float32)

    @pl.when(j == pl.num_programs(1) - 1)
    def _finalize():
        o_ref[...] = acc_ref[...].astype(o_ref.dtype)


def pack_llama_mlp_weights(gate_w, up_w, down_w, *, ti=None, dtype=jnp.bfloat16):
    """One-time weight packing (do this OUTSIDE the hot path).

    gate_w/up_w: (I, H)  [PyTorch nn.Linear layout (out, in)]
    down_w:      (H, I)

    Returns:
      wgu: (nI, H, 2*ti)  fused [gate | up], transposed to (in, out), dtype-cast
      wd:  (Ip, H)        down_proj transposed to (in, out), dtype-cast
      ti:  the I-tile size actually used (multiple of 256)
    """
    if ti is None:
        ti = _device_config()["ti"]
    I, H = gate_w.shape
    ti = min(ti, _round_up(I, 256))        # MXU-width-friendly tile, never > I (rounded)
    Ip = _round_up(I, ti)                  # zero-pad I so ti divides it (numerically safe)
    nI = Ip // ti
    pad_i = Ip - I

    gw = jnp.pad(gate_w, ((0, pad_i), (0, 0))).astype(dtype)   # (Ip, H)
    uw = jnp.pad(up_w, ((0, pad_i), (0, 0))).astype(dtype)     # (Ip, H)
    dw = jnp.pad(down_w, ((0, 0), (0, pad_i))).astype(dtype)   # (H, Ip)

    gw = gw.reshape(nI, ti, H).transpose(0, 2, 1)              # (nI, H, ti)
    uw = uw.reshape(nI, ti, H).transpose(0, 2, 1)              # (nI, H, ti)
    wgu = jnp.concatenate([gw, uw], axis=-1)                   # (nI, H, 2*ti)
    wd = dw.T                                                  # (Ip, H)
    return wgu, wd, ti


def llama_mlp(x, wgu, wd, *, tm=None, vmem_limit_bytes=None, out_dtype=None):
    """x: (B, S, H); wgu/wd: packed weights from pack_llama_mlp_weights.

    Pass out_dtype=jnp.bfloat16 (and feed bf16 x) when the surrounding model
    runs bf16 to halve output VMEM / HBM writeback.
    """
    cfg = _device_config()
    if tm is None:
        tm = cfg["tm"]
    if vmem_limit_bytes is None:
        vmem_limit_bytes = cfg["vmem"]
    if out_dtype is None:
        out_dtype = x.dtype

    B, S, H = x.shape
    nI, _, two_ti = wgu.shape
    ti = two_ti // 2
    Ip = nI * ti
    M = B * S

    # Token tiling: big tiles (>=128 rows when possible), pad ragged counts.
    m128 = _round_up(M, 128)
    tm = max(128, min(tm, m128))
    # v7x: make sure both TensorCores get token tiles when there is enough work.
    if cfg["num_tc"] >= 2 and m128 >= 256:
        tm = min(tm, _round_up(m128 // 2, 128))
    # Shrink tm until the double-buffered working set fits the scoped VMEM limit.
    x_bytes = jnp.dtype(x.dtype).itemsize
    o_bytes = jnp.dtype(out_dtype).itemsize
    w_bytes = jnp.dtype(wgu.dtype).itemsize
    while (tm > 128 and
           _vmem_estimate(tm, ti, H, x_bytes, o_bytes, w_bytes)
           > int(0.85 * vmem_limit_bytes)):
        tm = _round_up(tm // 2, 128)
    Mp = _round_up(M, tm)
    Mt = Mp // tm

    x2 = x.reshape(M, H)                         # no wrapper-side cast
    if Mp != M:
        x2 = jnp.pad(x2, ((0, Mp - M), (0, 0)))

    weight_bytes = (wgu.size * wgu.dtype.itemsize + wd.size * wd.dtype.itemsize)
    cost = pl.CostEstimate(
        flops=6 * Mp * H * Ip,                   # gate + up + down matmuls
        transcendentals=Mp * Ip,                 # sigmoid
        bytes_accessed=(x2.size * x2.dtype.itemsize
                        + Mt * weight_bytes
                        + Mp * H * o_bytes),
    )

    out = pl.pallas_call(
        _mlp_kernel,
        out_shape=jax.ShapeDtypeStruct((Mp, H), out_dtype),
        grid_spec=pltpu.PrefetchScalarGridSpec(
            num_scalar_prefetch=0,
            grid=(Mt, nI),                       # token axis parallel, I axis reduction
            in_specs=[
                pl.BlockSpec((tm, H), lambda i, j: (i, 0)),
                pl.BlockSpec((pl.Squeezed(), H, 2 * ti), lambda i, j: (j, 0, 0)),
                pl.BlockSpec((ti, H), lambda i, j: (j, 0)),
            ],
            out_specs=pl.BlockSpec((tm, H), lambda i, j: (i, 0)),
            scratch_shapes=[pltpu.VMEM((tm, H), jnp.float32)],
        ),
        compiler_params=pltpu.CompilerParams(
            dimension_semantics=("parallel", "arbitrary"),
            vmem_limit_bytes=vmem_limit_bytes,
        ),
        cost_estimate=cost,
    )(x2, wgu, wd)
    return out[:M].reshape(B, S, H)


if __name__ == "__main__":
    # Small config consistent with the module: hidden_size=128,
    # intermediate_size=256, hidden_act="silu", pretraining_tp=1.
    B, S, H, I = 2, 8, 128, 256

    key = jax.random.PRNGKey(0)
    kx, kg, ku, kd = jax.random.split(key, 4)

    x = jax.random.normal(kx, (B, S, H), dtype=jnp.float32)
    # PyTorch nn.Linear weight shapes: (out_features, in_features)
    gate_w = jax.random.normal(kg, (I, H), dtype=jnp.float32) * 0.02
    up_w = jax.random.normal(ku, (I, H), dtype=jnp.float32) * 0.02
    down_w = jax.random.normal(kd, (H, I), dtype=jnp.float32) * 0.02

    # One-time weight packing (outside the hot path).
    wgu, wd, ti = pack_llama_mlp_weights(gate_w, up_w, down_w)

    out = llama_mlp(x, wgu, wd)
    out = jax.block_until_ready(out)
    assert out.shape == (B, S, H)

    # Reference with matching numerics: bf16 matmul inputs, f32 accumulation,
    # f32 SiLU, bf16 intermediate into down_proj.
    xb = x.astype(jnp.bfloat16)
    g = jnp.einsum("bsh,ih->bsi", xb, gate_w.astype(jnp.bfloat16),
                   preferred_element_type=jnp.float32)
    u = jnp.einsum("bsh,ih->bsi", xb, up_w.astype(jnp.bfloat16),
                   preferred_element_type=jnp.float32)
    h = (g * jax.nn.sigmoid(g) * u).astype(jnp.bfloat16)
    ref = jnp.einsum("bsi,hi->bsh", h, down_w.astype(jnp.bfloat16),
                     preferred_element_type=jnp.float32)

    assert jnp.allclose(out, ref.astype(out.dtype), atol=2e-3, rtol=2e-2), (
        float(jnp.max(jnp.abs(out - ref)))
    )

    print("KERNEL_OK")
</pallas_src>

<mosaic_0001>
module attributes {stable_mosaic.version = 11 : i64} {
  func.func @_mlp_kernel(%arg0: i32, %arg1: i32, %arg2: memref<128x128xf32, #tpu.memory_space<vmem>>, %arg3: memref<1x128x512xbf16, #tpu.memory_space<vmem>>, %arg4: memref<256x128xbf16, #tpu.memory_space<vmem>>, %arg5: memref<128x128xf32, #tpu.memory_space<vmem>>, %arg6: memref<128x128xf32, #tpu.memory_space<vmem>>) attributes {dimension_semantics = [#tpu.dimension_semantics<parallel>, #tpu.dimension_semantics<arbitrary>], iteration_bounds = array<i64: 1, 1>, scalar_prefetch = 0 : i64, scratch_operands = 1 : i64, tpu.core_type = #tpu.core_type<tc>, window_params = [{transform_indices = @transform_0, window_bounds = array<i64: 128, 128>}, {transform_indices = @transform_1, window_bounds = array<i64: 1, 128, 512>}, {transform_indices = @transform_2, window_bounds = array<i64: 256, 128>}, {transform_indices = @transform_3, window_bounds = array<i64: 128, 128>}]} {
    %c0_i32 = arith.constant 0 : i32
    %0 = arith.cmpi eq, %arg1, %c0_i32 : i32
    %1 = arith.extui %0 : i1 to i32
    %c0_i32_0 = arith.constant 0 : i32
    %2 = arith.cmpi ne, %1, %c0_i32_0 : i32
    scf.if %2 {
      %cst_15 = arith.constant 0.000000e+00 : f32
      %26 = vector.broadcast %cst_15 : f32 to vector<128x128xf32>
      %c0_16 = arith.constant 0 : index
      %c0_17 = arith.constant 0 : index
      %27 = vector.load %arg6[%c0_16, %c0_17] : memref<128x128xf32, #tpu.memory_space<vmem>>, vector<128x128xf32>
      tpu.vector_store %arg6[%c0_16, %c0_17], %26 {strides = array<i32>} : memref<128x128xf32, #tpu.memory_space<vmem>>, vector<128x128xf32>,
    } else {
    }
    %c0 = arith.constant 0 : index
    %c0_1 = arith.constant 0 : index
    %3 = vector.load %arg2[%c0, %c0_1] : memref<128x128xf32, #tpu.memory_space<vmem>>, vector<128x128xf32>
    %4 = arith.truncf %3 : vector<128x128xf32> to vector<128x128xbf16>
    %c0_2 = arith.constant 0 : index
    %c0_3 = arith.constant 0 : index
    %c0_4 = arith.constant 0 : index
    %5 = vector.load %arg3[%c0_2, %c0_3, %c0_4] : memref<1x128x512xbf16, #tpu.memory_space<vmem>>, vector<1x128x512xbf16>
    %6 = vector.shape_cast %5 : vector<1x128x512xbf16> to vector<128x512xbf16>
    %cst = arith.constant dense<0.000000e+00> : vector<128x512xf32>
    %7 = tpu.matmul %4, %6, %cst {dimension_numbers = #tpu.dot_dimension_numbers<[1], [0], [0], [1], [0, 0, 1, 1], [], []>} : vector<128x128xbf16>, vector<128x512xbf16>, vector<128x512xf32> -> vector<128x512xf32>
    %8 = vector.extract_strided_slice %7 {offsets = [0, 0], sizes = [128, 256], strides = [1, 1]} : vector<128x512xf32> to vector<128x256xf32>
    %9 = vector.extract_strided_slice %7 {offsets = [0, 256], sizes = [128, 256], strides = [1, 1]} : vector<128x512xf32> to vector<128x256xf32>
    %10 = arith.negf %8 : vector<128x256xf32>
    %11 = math.exp %10 : vector<128x256xf32>
    %cst_5 = arith.constant 1.000000e+00 : f32
    %12 = vector.broadcast %cst_5 : f32 to vector<128x256xf32>
    %13 = arith.addf %12, %11 : vector<128x256xf32>
    %14 = arith.divf %12, %13 : vector<128x256xf32>
    %15 = arith.mulf %8, %14 : vector<128x256xf32>
    %16 = arith.mulf %15, %9 : vector<128x256xf32>
    %c0_6 = arith.constant 0 : index
    %c0_7 = arith.constant 0 : index
    %17 = vector.load %arg6[%c0_6, %c0_7] : memref<128x128xf32, #tpu.memory_space<vmem>>, vector<128x128xf32>
    %18 = arith.truncf %16 : vector<128x256xf32> to vector<128x256xbf16>
    %c0_8 = arith.constant 0 : index
    %c0_9 = arith.constant 0 : index
    %19 = vector.load %arg4[%c0_8, %c0_9] : memref<256x128xbf16, #tpu.memory_space<vmem>>, vector<256x128xbf16>
    %cst_10 = arith.constant dense<0.000000e+00> : vector<128x128xf32>
    %20 = tpu.matmul %18, %19, %cst_10 {dimension_numbers = #tpu.dot_dimension_numbers<[1], [0], [0], [1], [0, 0, 1, 1], [], []>} : vector<128x256xbf16>, vector<256x128xbf16>, vector<128x128xf32> -> vector<128x128xf32>
    %21 = arith.addf %17, %20 : vector<128x128xf32>
    %c0_11 = arith.constant 0 : index
    %c0_12 = arith.constant 0 : index
    %22 = vector.load %arg6[%c0_11, %c0_12] : memref<128x128xf32, #tpu.memory_space<vmem>>, vector<128x128xf32>
    tpu.vector_store %arg6[%c0_11, %c0_12], %21 {strides = array<i32>} : memref<128x128xf32, #tpu.memory_space<vmem>>, vector<128x128xf32>,
    %c0_i32_13 = arith.constant 0 : i32
    %23 = arith.cmpi eq, %arg1, %c0_i32_13 : i32
    %24 = arith.extui %23 : i1 to i32
    %c0_i32_14 = arith.constant 0 : i32
    %25 = arith.cmpi ne, %24, %c0_i32_14 : i32
    scf.if %25 {
      %c0_15 = arith.constant 0 : index
      %c0_16 = arith.constant 0 : index
      %26 = vector.load %arg6[%c0_15, %c0_16] : memref<128x128xf32, #tpu.memory_space<vmem>>, vector<128x128xf32>
      %c0_17 = arith.constant 0 : index
      %c0_18 = arith.constant 0 : index
      %27 = vector.load %arg5[%c0_17, %c0_18] : memref<128x128xf32, #tpu.memory_space<vmem>>, vector<128x128xf32>
      tpu.vector_store %arg5[%c0_17, %c0_18], %26 {strides = array<i32>} : memref<128x128xf32, #tpu.memory_space<vmem>>, vector<128x128xf32>,
    } else {
    }
    return
  }
  func.func @transform_0(%arg0: i32, %arg1: i32) -> (i32, i32) {
    %c0_i32 = arith.constant 0 : i32
    %c0_i32_0 = arith.constant 0 : i32
    return %arg0, %c0_i32 : i32, i32
  }
  func.func @transform_1(%arg0: i32, %arg1: i32) -> (i32, i32, i32) {
    %c0_i32 = arith.constant 0 : i32
    %c0_i32_0 = arith.constant 0 : i32
    %c0_i32_1 = arith.constant 0 : i32
    return %arg1, %c0_i32, %c0_i32_0 : i32, i32, i32
  }
  func.func @transform_2(%arg0: i32, %arg1: i32) -> (i32, i32) {
    %c0_i32 = arith.constant 0 : i32
    %c0_i32_0 = arith.constant 0 : i32
    return %arg1, %c0_i32 : i32, i32
  }
  func.func @transform_3(%arg0: i32, %arg1: i32) -> (i32, i32) {
    %c0_i32 = arith.constant 0 : i32
    %c0_i32_0 = arith.constant 0 : i32
    return %arg0, %c0_i32 : i32, i32
  }
}

</mosaic_0001>

<llo_original>
// kernel: tpu_custom_call.1
$region0: #{tpu_custom_call.1}
  #allocation0 [shape = 'u32[]', space=smem, size = 0x4, offset = 0x4, fixed_abs, tag = 'smem constant byte address 0x4 - core index']
  #allocation1 [shape = 'u32[144,128]{1,0:T(1,128)}', space=vmem, size = 0x12000, scoped, tag = 'internal scratch']
  #allocation2 [shape = 'f32[128,128]{1,0:T(8,128)}', space=vmem, size = 0x10000, scoped, tag = 'scratch operand']
  %s0 = inlined_call_operand.hbm [shape: f32[128,128], index: 0, kind: input, shape index: {}]
  %s1 = inlined_call_operand.hbm [shape: bf16[1,128,512], index: 1, kind: input, shape index: {}]
  %s2 = inlined_call_operand.hbm [shape: bf16[256,128], index: 2, kind: input, shape index: {}]
  %s3 = inlined_call_operand.hbm [shape: f32[128,128], index: 3, kind: output, shape index: {}]
  %s4 = sld [smem:[#allocation0]]
  $region42: #{tpu_custom_call.1} parent=0
    _
  %s6 = ssub.s32 1, %s4
  %s7 = scalar_select 0, %s6, %s4
  $region1: #{tpu_custom_call.1} parent=0
    #allocation3 [shape = 'u8[65536]{0}', space=vmem, size = 0x10000, scoped, tag = 'input window, operand 0, single buffered']
    #allocation4 [shape = 's32[1]{0}', space=sflag, size = 0x4, scoped, tag = 'scoped memory for tpu_custom_call.1']
    #allocation5 [shape = 's32[1]{0}', space=sflag, size = 0x4, scoped, tag = 'scoped memory for tpu_custom_call.1']
    #allocation6 [shape = 'u8[131072]{0}', space=vmem, size = 0x20000, scoped, tag = 'input window, operand 1, single buffered']
    #allocation7 [shape = 's32[1]{0}', space=sflag, size = 0x4, scoped, tag = 'scoped memory for tpu_custom_call.1']
    #allocation8 [shape = 'u8[65536]{0}', space=vmem, size = 0x10000, scoped, tag = 'input window, operand 2, single buffered']
    #allocation9 [shape = 'u8[65536]{0}', space=vmem, size = 0x10000, scoped, tag = 'output window, operand 0, single buffered']
    %8 = vsyncpa [#allocation4], 0
    %9 = vsyncpa [#allocation7], 0
    %10 = vsyncpa [#allocation5], 0
    // Predicated region
    $region2: #{tpu_custom_call.1} parent=1 // pred_check
      _
    $region3: #{tpu_custom_call.1} parent=1 // pred_check_branch
      %12 = sbr.rel (0) target = $region5
    $region4: #{tpu_custom_call.1} parent=1 // pred_region
      %s14 = ssub.s32 2048, 2048
      %15 = vsyncadd [#allocation4], %s14
      %s16 = sshll.u32 [#allocation3], 4
      %s17 = int_to_ptr.vmem [resolvable:$true] %s16
      %22 = dma.hbm_to_vmem [thread:$0]  %s0, 2048, %s17, [#allocation4], 128, 128, 8
    $region5: #{tpu_custom_call.1} parent=1 // pred_fallthru
      _
    // Predicated region
    $region6: #{tpu_custom_call.1} parent=1 // pred_check
      _
    $region7: #{tpu_custom_call.1} parent=1 // pred_check_branch
      %24 = sbr.rel (0) target = $region9
    $region8: #{tpu_custom_call.1} parent=1 // pred_region
      %s26 = ssub.s32 4096, 4096
      %27 = vsyncadd [#allocation7], %s26
      %s28 = sshll.u32 [#allocation6], 4
      %s29 = int_to_ptr.vmem [resolvable:$true] %s28
      %34 = dma.hbm_to_vmem [thread:$0]  %s1, 4096, %s29, [#allocation7], 256, 256, 16
    $region9: #{tpu_custom_call.1} parent=1 // pred_fallthru
      _
    // Predicated region
    $region10: #{tpu_custom_call.1} parent=1 // pred_check
      _
    $region11: #{tpu_custom_call.1} parent=1 // pred_check_branch
      %36 = sbr.rel (0) target = $region13
    $region12: #{tpu_custom_call.1} parent=1 // pred_region
      %s38 = ssub.s32 2048, 2048
      %39 = vsyncadd [#allocation7], %s38
      %s40 = sshll.u32 [#allocation8], 4
      %s41 = int_to_ptr.vmem [resolvable:$true] %s40
      %46 = dma.hbm_to_vmem [thread:$0]  %s2, 2048, %s41, [#allocation7], 64, 64, 4
    $region13: #{tpu_custom_call.1} parent=1 // pred_fallthru
      _
    // Predicated region
    $region14: #{tpu_custom_call.1} parent=1 // pred_check
      _
    $region15: #{tpu_custom_call.1} parent=1 // pred_check_branch
      %48 = sbr.rel (0) target = $region17
    $region16: #{tpu_custom_call.1} parent=1 // pred_region
      %49 = dma.done [#allocation4], 2048
    $region17: #{tpu_custom_call.1} parent=1 // pred_fallthru
      _
    // Predicated region
    $region18: #{tpu_custom_call.1} parent=1 // pred_check
      _
    $region19: #{tpu_custom_call.1} parent=1 // pred_check_branch
      %51 = sbr.rel (0) target = $region21
    $region20: #{tpu_custom_call.1} parent=1 // pred_region
      %52 = dma.done [#allocation7], 4096
    $region21: #{tpu_custom_call.1} parent=1 // pred_fallthru
      _
    // Predicated region
    $region22: #{tpu_custom_call.1} parent=1 // pred_check
      _
    $region23: #{tpu_custom_call.1} parent=1 // pred_check_branch
      %54 = sbr.rel (0) target = $region25
    $region24: #{tpu_custom_call.1} parent=1 // pred_region
      %55 = dma.done [#allocation7], 2048
    $region25: #{tpu_custom_call.1} parent=1 // pred_fallthru
      _
    %p57 = scmp.eq.s32.totalorder 0, 0
    // Predicated region
    $region26: #{tpu_custom_call.1} parent=1 // pred_check
      %p58 = pneg %p57
    $region27: #{tpu_custom_call.1} parent=1 // pred_check_branch
      %60 = sbr.rel (%p58) target = $region29
    $region28: #{tpu_custom_call.1} parent=1 // pred_region
      %61 = vst [vmem:[#allocation2] sm:$0xff] 0.0
      %62 = vst [vmem:[#allocation2 + $0x8] sm:$0xff] 0.0
      %63 = vst [vmem:[#allocation2 + $0x10] sm:$0xff] 0.0
      %64 = vst [vmem:[#allocation2 + $0x18] sm:$0xff] 0.0
      %65 = vst [vmem:[#allocation2 + $0x20] sm:$0xff] 0.0
      %66 = vst [vmem:[#allocation2 + $0x28] sm:$0xff] 0.0
      %67 = vst [vmem:[#allocation2 + $0x30] sm:$0xff] 0.0
      %68 = vst [vmem:[#allocation2 + $0x38] sm:$0xff] 0.0
      %69 = vst [vmem:[#allocation2 + $0x40] sm:$0xff] 0.0
      %70 = vst [vmem:[#allocation2 + $0x48] sm:$0xff] 0.0
      %71 = vst [vmem:[#allocation2 + $0x50] sm:$0xff] 0.0
      %72 = vst [vmem:[#allocation2 + $0x58] sm:$0xff] 0.0
      %73 = vst [vmem:[#allocation2 + $0x60] sm:$0xff] 0.0
      %74 = vst [vmem:[#allocation2 + $0x68] sm:$0xff] 0.0
      %75 = vst [vmem:[#allocation2 + $0x70] sm:$0xff] 0.0
      %76 = vst [vmem:[#allocation2 + $0x78] sm:$0xff] 0.0
    $region29: #{tpu_custom_call.1} parent=1 // pred_fallthru
      _
    %v77 = vld [vmem:[#allocation3] sm:$0xff]
    %v78 = vld [vmem:[#allocation3 + $0x8] sm:$0xff]
    %v79 = vld [vmem:[#allocation3 + $0x10] sm:$0xff]
    %v80 = vld [vmem:[#allocation3 + $0x18] sm:$0xff]
    %v81 = vld [vmem:[#allocation3 + $0x20] sm:$0xff]
    %v82 = vld [vmem:[#allocation3 + $0x28] sm:$0xff]
    %v83 = vld [vmem:[#allocation3 + $0x30] sm:$0xff]
    %v84 = vld [vmem:[#allocation3 + $0x38] sm:$0xff]
    %v85 = vld [vmem:[#allocation3 + $0x40] sm:$0xff]
    %v86 = vld [vmem:[#allocation3 + $0x48] sm:$0xff]
    %v87 = vld [vmem:[#allocation3 + $0x50] sm:$0xff]
    %v88 = vld [vmem:[#allocation3 + $0x58] sm:$0xff]
    %v89 = vld [vmem:[#allocation3 + $0x60] sm:$0xff]
    %v90 = vld [vmem:[#allocation3 + $0x68] sm:$0xff]
    %v91 = vld [vmem:[#allocation3 + $0x70] sm:$0xff]
    %v92 = vld [vmem:[#allocation3 + $0x78] sm:$0xff]
    %v93 = vpack.c.bf16 %v78, %v77
    %v94 = vpack.c.bf16 %v80, %v79
    %v95 = vpack.c.bf16 %v82, %v81
    %v96 = vpack.c.bf16 %v84, %v83
    %v97 = vpack.c.bf16 %v86, %v85
    %v98 = vpack.c.bf16 %v88, %v87
    %v99 = vpack.c.bf16 %v90, %v89
    %v100 = vpack.c.bf16 %v92, %v91
    %v101 = vld [vmem:[#allocation6] sm:$0xff]
    %v102 = vld [vmem:[#allocation6 + $0x8] sm:$0xff]
    %v103 = vld [vmem:[#allocation6 + $0x10] sm:$0xff]
    %v104 = vld [vmem:[#allocation6 + $0x18] sm:$0xff]
    %v105 = vld [vmem:[#allocation6 + $0x20] sm:$0xff]
    %v106 = vld [vmem:[#allocation6 + $0x28] sm:$0xff]
    %v107 = vld [vmem:[#allocation6 + $0x30] sm:$0xff]
    %v108 = vld [vmem:[#allocation6 + $0x38] sm:$0xff]
    %v109 = vld [vmem:[#allocation6 + $0x40] sm:$0xff]
    %v110 = vld [vmem:[#allocation6 + $0x48] sm:$0xff]
    %v111 = vld [vmem:[#allocation6 + $0x50] sm:$0xff]
    %v112 = vld [vmem:[#allocation6 + $0x58] sm:$0xff]
    %v113 = vld [vmem:[#allocation6 + $0x60] sm:$0xff]
    %v114 = vld [vmem:[#allocation6 + $0x68] sm:$0xff]
    %v115 = vld [vmem:[#allocation6 + $0x70] sm:$0xff]
    %v116 = vld [vmem:[#allocation6 + $0x78] sm:$0xff]
    %v117 = vld [vmem:[#allocation6 + $0x80] sm:$0xff]
    %v118 = vld [vmem:[#allocation6 + $0x88] sm:$0xff]
    %v119 = vld [vmem:[#allocation6 + $0x90] sm:$0xff]
    %v120 = vld [vmem:[#allocation6 + $0x98] sm:$0xff]
    %v121 = vld [vmem:[#allocation6 + $0xa0] sm:$0xff]
    %v122 = vld [vmem:[#allocation6 + $0xa8] sm:$0xff]
    %v123 = vld [vmem:[#allocation6 + $0xb0] sm:$0xff]
    %v124 = vld [vmem:[#allocation6 + $0xb8] sm:$0xff]
    %v125 = vld [vmem:[#allocation6 + $0xc0] sm:$0xff]
    %v126 = vld [vmem:[#allocation6 + $0xc8] sm:$0xff]
    %v127 = vld [vmem:[#allocation6 + $0xd0] sm:$0xff]
    %v128 = vld [vmem:[#allocation6 + $0xd8] sm:$0xff]
    %v129 = vld [vmem:[#allocation6 + $0xe0] sm:$0xff]
    %v130 = vld [vmem:[#allocation6 + $0xe8] sm:$0xff]
    %v131 = vld [vmem:[#allocation6 + $0xf0] sm:$0xff]
    %v132 = vld [vmem:[#allocation6 + $0xf8] sm:$0xff]
    %v165 = vunpack.c.l.b16 %v101
    %v166 = vunpack.c.h.b16 %v101
    %v167 = vunpack.c.l.b16 %v102
    %v168 = vunpack.c.h.b16 %v102
    %v169 = vunpack.c.l.b16 %v103
    %v170 = vunpack.c.h.b16 %v103
    %v171 = vunpack.c.l.b16 %v104
    %v172 = vunpack.c.h.b16 %v104
    %v173 = vunpack.c.l.b16 %v105
    %v174 = vunpack.c.h.b16 %v105
    %v175 = vunpack.c.l.b16 %v106
    %v176 = vunpack.c.h.b16 %v106
    %v177 = vunpack.c.l.b16 %v107
    %v178 = vunpack.c.h.b16 %v107
    %v179 = vunpack.c.l.b16 %v108
    %v180 = vunpack.c.h.b16 %v108
    %v181 = vunpack.c.l.b16 %v109
    %v182 = vunpack.c.h.b16 %v109
    %v183 = vunpack.c.l.b16 %v110
    %v184 = vunpack.c.h.b16 %v110
    %v185 = vunpack.c.l.b16 %v111
    %v186 = vunpack.c.h.b16 %v111
    %v187 = vunpack.c.l.b16 %v112
    %v188 = vunpack.c.h.b16 %v112
    %v189 = vunpack.c.l.b16 %v113
    %v190 = vunpack.c.h.b16 %v113
    %v191 = vunpack.c.l.b16 %v114
    %v192 = vunpack.c.h.b16 %v114
    %v193 = vunpack.c.l.b16 %v115
    %v194 = vunpack.c.h.b16 %v115
    %v195 = vunpack.c.l.b16 %v116
    %v196 = vunpack.c.h.b16 %v116
    %v197 = vunpack.c.l.b16 %v117
    %v198 = vunpack.c.h.b16 %v117
    %v199 = vunpack.c.l.b16 %v118
    %v200 = vunpack.c.h.b16 %v118
    %v201 = vunpack.c.l.b16 %v119
    %v202 = vunpack.c.h.b16 %v119
    %v203 = vunpack.c.l.b16 %v120
    %v204 = vunpack.c.h.b16 %v120
    %v205 = vunpack.c.l.b16 %v121
    %v206 = vunpack.c.h.b16 %v121
    %v207 = vunpack.c.l.b16 %v122
    %v208 = vunpack.c.h.b16 %v122
    %v209 = vunpack.c.l.b16 %v123
    %v210 = vunpack.c.h.b16 %v123
    %v211 = vunpack.c.l.b16 %v124
    %v212 = vunpack.c.h.b16 %v124
    %v213 = vunpack.c.l.b16 %v125
    %v214 = vunpack.c.h.b16 %v125
    %v215 = vunpack.c.l.b16 %v126
    %v216 = vunpack.c.h.b16 %v126
    %v217 = vunpack.c.l.b16 %v127
    %v218 = vunpack.c.h.b16 %v127
    %v219 = vunpack.c.l.b16 %v128
    %v220 = vunpack.c.h.b16 %v128
    %v221 = vunpack.c.l.b16 %v129
    %v222 = vunpack.c.h.b16 %v129
    %v223 = vunpack.c.l.b16 %v130
    %v224 = vunpack.c.h.b16 %v130
    %v225 = vunpack.c.l.b16 %v131
    %v226 = vunpack.c.h.b16 %v131
    %v227 = vunpack.c.l.b16 %v132
    %v228 = vunpack.c.h.b16 %v132
    %v229 = vpack.c.b16 %v169, %v165
    %v230 = vpack.c.b16 %v170, %v166
    %v231 = vpack.c.b16 %v171, %v167
    %v232 = vpack.c.b16 %v172, %v168
    %v233 = vpack.c.b16 %v177, %v173
    %v234 = vpack.c.b16 %v178, %v174
    %v235 = vpack.c.b16 %v179, %v175
    %v236 = vpack.c.b16 %v180, %v176
    %v237 = vpack.c.b16 %v185, %v181
    %v238 = vpack.c.b16 %v186, %v182
    %v239 = vpack.c.b16 %v187, %v183
    %v240 = vpack.c.b16 %v188, %v184
    %v241 = vpack.c.b16 %v193, %v189
    %v242 = vpack.c.b16 %v194, %v190
    %v243 = vpack.c.b16 %v195, %v191
    %v244 = vpack.c.b16 %v196, %v192
    %v245 = vpack.c.b16 %v201, %v197
    %v246 = vpack.c.b16 %v202, %v198
    %v247 = vpack.c.b16 %v203, %v199
    %v248 = vpack.c.b16 %v204, %v200
    %v249 = vpack.c.b16 %v209, %v205
    %v250 = vpack.c.b16 %v210, %v206
    %v251 = vpack.c.b16 %v211, %v207
    %v252 = vpack.c.b16 %v212, %v208
    %v253 = vpack.c.b16 %v217, %v213
    %v254 = vpack.c.b16 %v218, %v214
    %v255 = vpack.c.b16 %v219, %v215
    %v256 = vpack.c.b16 %v220, %v216
    %v257 = vpack.c.b16 %v225, %v221
    %v258 = vpack.c.b16 %v226, %v222
    %v259 = vpack.c.b16 %v227, %v223
    %v260 = vpack.c.b16 %v228, %v224
    %293 = vmatprep.subr.bf16.mxu0 %v258
    %294 = vmatpush1.bf16.msra.mxu0 %v257
    %295 = vmatprep.subr.bf16.mxu0 %v254
    %296 = vmatpush1.bf16.msra.mxu0 %v253
    %297 = vmatprep.subr.bf16.mxu0 %v250
    %298 = vmatpush1.bf16.msra.mxu0 %v249
    %299 = vmatprep.subr.bf16.mxu0 %v246
    %300 = vmatpush1.bf16.msra.mxu0 %v245
    %301 = vmatprep.subr.bf16.mxu0 %v242
    %302 = vmatpush1.bf16.msra.mxu0 %v241
    %303 = vmatprep.subr.bf16.mxu0 %v238
    %304 = vmatpush1.bf16.msra.mxu0 %v237
    %305 = vmatprep.subr.bf16.mxu0 %v234
    %306 = vmatpush1.bf16.msra.mxu0 %v233
    %307 = vmatprep.subr.bf16.mxu0 %v230
    %308 = vmatpush1.bf16.msra.mxu0 %v229
    %309 = vmatprep.subr.bf16.mxu0 0
    %310 = vmatpush2.bf16.msra.mxu0 0
    %311 = vmatprep.subr.bf16.mxu0 0
    %312 = vmatpush2.bf16.msra.mxu0 0
    %313 = vmatprep.subr.bf16.mxu0 0
    %314 = vmatpush2.bf16.msra.mxu0 0
    %315 = vmatprep.subr.bf16.mxu0 0
    %316 = vmatpush2.bf16.msra.mxu0 0
    %317 = vmatprep.subr.bf16.mxu0 0
    %318 = vmatpush2.bf16.msra.mxu0 0
    %319 = vmatprep.subr.bf16.mxu0 0
    %320 = vmatpush2.bf16.msra.mxu0 0
    %321 = vmatprep.subr.bf16.mxu0 0
    %322 = vmatpush2.bf16.msra.mxu0 0
    %323 = vmatprep.subr.bf16.mxu0 0
    %324 = vmatpush2.bf16.msra.mxu0 0
    %325 = vmatprep.mubr.bf16.mxu0 0
    %326 = vmatmul.mubr.bf16.gmra.mxu0 %v93
    %v327 = vpop.f32.mrf.mxu0
    %v328 = vadd.f32 0.0, %v327
    %v329 = vpop.f32.mrf.mxu0
    %v330 = vadd.f32 0.0, %v329
    %v331 = vpop.f32.mrf.mxu0
    %v332 = vadd.f32 0.0, %v331
    %v333 = vpop.f32.mrf.mxu0
    %v334 = vadd.f32 0.0, %v333
    %335 = vmatprep.mubr.bf16.mxu0 0
    %336 = vmatmul.mubr.bf16.gmra.mxu0 %v94
    %v337 = vpop.f32.mrf.mxu0
    %v338 = vadd.f32 0.0, %v337
    %v339 = vpop.f32.mrf.mxu0
    %v340 = vadd.f32 0.0, %v339
    %v341 = vpop.f32.mrf.mxu0
    %v342 = vadd.f32 0.0, %v341
    %v343 = vpop.f32.mrf.mxu0
    %v344 = vadd.f32 0.0, %v343
    %345 = vmatprep.mubr.bf16.mxu0 0
    %346 = vmatmul.mubr.bf16.gmra.mxu0 %v95
    %v347 = vpop.f32.mrf.mxu0
    %v348 = vadd.f32 0.0, %v347
    %v349 = vpop.f32.mrf.mxu0
    %v350 = vadd.f32 0.0, %v349
    %v351 = vpop.f32.mrf.mxu0
    %v352 = vadd.f32 0.0, %v351
    %v353 = vpop.f32.mrf.mxu0
    %v354 = vadd.f32 0.0, %v353
    %355 = vmatprep.mubr.bf16.mxu0 0
    %356 = vmatmul.mubr.bf16.gmra.mxu0 %v96
    %v357 = vpop.f32.mrf.mxu0
    %v358 = vadd.f32 0.0, %v357
    %v359 = vpop.f32.mrf.mxu0
    %v360 = vadd.f32 0.0, %v359
    %v361 = vpop.f32.mrf.mxu0
    %v362 = vadd.f32 0.0, %v361
    %v363 = vpop.f32.mrf.mxu0
    %v364 = vadd.f32 0.0, %v363
    %365 = vmatprep.mubr.bf16.mxu0 0
    %366 = vmatmul.mubr.bf16.gmra.mxu0 %v97
    %v367 = vpop.f32.mrf.mxu0
    %v368 = vadd.f32 0.0, %v367
    %v369 = vpop.f32.mrf.mxu0
    %v370 = vadd.f32 0.0, %v369
    %v371 = vpop.f32.mrf.mxu0
    %v372 = vadd.f32 0.0, %v371
    %v373 = vpop.f32.mrf.mxu0
    %v374 = vadd.f32 0.0, %v373
    %375 = vmatprep.mubr.bf16.mxu0 0
    %376 = vmatmul.mubr.bf16.gmra.mxu0 %v98
    %v377 = vpop.f32.mrf.mxu0
    %v378 = vadd.f32 0.0, %v377
    %v379 = vpop.f32.mrf.mxu0
    %v380 = vadd.f32 0.0, %v379
    %v381 = vpop.f32.mrf.mxu0
    %v382 = vadd.f32 0.0, %v381
    %v383 = vpop.f32.mrf.mxu0
    %v384 = vadd.f32 0.0, %v383
    %385 = vmatprep.mubr.bf16.mxu0 0
    %386 = vmatmul.mubr.bf16.gmra.mxu0 %v99
    %v387 = vpop.f32.mrf.mxu0
    %v388 = vadd.f32 0.0, %v387
    %v389 = vpop.f32.mrf.mxu0
    %v390 = vadd.f32 0.0, %v389
    %v391 = vpop.f32.mrf.mxu0
    %v392 = vadd.f32 0.0, %v391
    %v393 = vpop.f32.mrf.mxu0
    %v394 = vadd.f32 0.0, %v393
    %395 = vmatprep.mubr.bf16.mxu0 0
    %396 = vmatmul.mubr.bf16.gmra.mxu0 %v100
    %v397 = vpop.f32.mrf.mxu0
    %v398 = vadd.f32 0.0, %v397
    %v399 = vpop.f32.mrf.mxu0
    %v400 = vadd.f32 0.0, %v399
    %v401 = vpop.f32.mrf.mxu0
    %v402 = vadd.f32 0.0, %v401
    %v403 = vpop.f32.mrf.mxu0
    %v404 = vadd.f32 0.0, %v403
    %405 = vdwg.mxu0
    %406 = vmatprep.subr.bf16.mxu0 %v260
    %407 = vmatpush1.bf16.msra.mxu0 %v259
    %408 = vmatprep.subr.bf16.mxu0 %v256
    %409 = vmatpush1.bf16.msra.mxu0 %v255
    %410 = vmatprep.subr.bf16.mxu0 %v252
    %411 = vmatpush1.bf16.msra.mxu0 %v251
    %412 = vmatprep.subr.bf16.mxu0 %v248
    %413 = vmatpush1.bf16.msra.mxu0 %v247
    %414 = vmatprep.subr.bf16.mxu0 %v244
    %415 = vmatpush1.bf16.msra.mxu0 %v243
    %416 = vmatprep.subr.bf16.mxu0 %v240
    %417 = vmatpush1.bf16.msra.mxu0 %v239
    %418 = vmatprep.subr.bf16.mxu0 %v236
    %419 = vmatpush1.bf16.msra.mxu0 %v235
    %420 = vmatprep.subr.bf16.mxu0 %v232
    %421 = vmatpush1.bf16.msra.mxu0 %v231
    %422 = vmatprep.subr.bf16.mxu0 0
    %423 = vmatpush2.bf16.msra.mxu0 0
    %424 = vmatprep.subr.bf16.mxu0 0
    %425 = vmatpush2.bf16.msra.mxu0 0
    %426 = vmatprep.subr.bf16.mxu0 0
    %427 = vmatpush2.bf16.msra.mxu0 0
    %428 = vmatprep.subr.bf16.mxu0 0
    %429 = vmatpush2.bf16.msra.mxu0 0
    %430 = vmatprep.subr.bf16.mxu0 0
    %431 = vmatpush2.bf16.msra.mxu0 0
    %432 = vmatprep.subr.bf16.mxu0 0
    %433 = vmatpush2.bf16.msra.mxu0 0
    %434 = vmatprep.subr.bf16.mxu0 0
    %435 = vmatpush2.bf16.msra.mxu0 0
    %436 = vmatprep.subr.bf16.mxu0 0
    %437 = vmatpush2.bf16.msra.mxu0 0
    %438 = vmatprep.mubr.bf16.mxu0 0
    %439 = vmatmul.mubr.bf16.gmra.mxu0 %v93
    %v440 = vpop.f32.mrf.mxu0
    %v441 = vadd.f32 0.0, %v440
    %v442 = vpop.f32.mrf.mxu0
    %v443 = vadd.f32 0.0, %v442
    %v444 = vpop.f32.mrf.mxu0
    %v445 = vadd.f32 0.0, %v444
    %v446 = vpop.f32.mrf.mxu0
    %v447 = vadd.f32 0.0, %v446
    %448 = vmatprep.mubr.bf16.mxu0 0
    %449 = vmatmul.mubr.bf16.gmra.mxu0 %v94
    %v450 = vpop.f32.mrf.mxu0
    %v451 = vadd.f32 0.0, %v450
    %v452 = vpop.f32.mrf.mxu0
    %v453 = vadd.f32 0.0, %v452
    %v454 = vpop.f32.mrf.mxu0
    %v455 = vadd.f32 0.0, %v454
    %v456 = vpop.f32.mrf.mxu0
    %v457 = vadd.f32 0.0, %v456
    %458 = vmatprep.mubr.bf16.mxu0 0
    %459 = vmatmul.mubr.bf16.gmra.mxu0 %v95
    %v460 = vpop.f32.mrf.mxu0
    %v461 = vadd.f32 0.0, %v460
    %v462 = vpop.f32.mrf.mxu0
    %v463 = vadd.f32 0.0, %v462
    %v464 = vpop.f32.mrf.mxu0
    %v465 = vadd.f32 0.0, %v464
    %v466 = vpop.f32.mrf.mxu0
    %v467 = vadd.f32 0.0, %v466
    %468 = vmatprep.mubr.bf16.mxu0 0
    %469 = vmatmul.mubr.bf16.gmra.mxu0 %v96
    %v470 = vpop.f32.mrf.mxu0
    %v471 = vadd.f32 0.0, %v470
    %v472 = vpop.f32.mrf.mxu0
    %v473 = vadd.f32 0.0, %v472
    %v474 = vpop.f32.mrf.mxu0
    %v475 = vadd.f32 0.0, %v474
    %v476 = vpop.f32.mrf.mxu0
    %v477 = vadd.f32 0.0, %v476
    %478 = vmatprep.mubr.bf16.mxu0 0
    %479 = vmatmul.mubr.bf16.gmra.mxu0 %v97
    %v480 = vpop.f32.mrf.mxu0
    %v481 = vadd.f32 0.0, %v480
    %v482 = vpop.f32.mrf.mxu0
    %v483 = vadd.f32 0.0, %v482
    %v484 = vpop.f32.mrf.mxu0
    %v485 = vadd.f32 0.0, %v484
    %v486 = vpop.f32.mrf.mxu0
    %v487 = vadd.f32 0.0, %v486
    %488 = vmatprep.mubr.bf16.mxu0 0
    %489 = vmatmul.mubr.bf16.gmra.mxu0 %v98
    %v490 = vpop.f32.mrf.mxu0
    %v491 = vadd.f32 0.0, %v490
    %v492 = vpop.f32.mrf.mxu0
    %v493 = vadd.f32 0.0, %v492
    %v494 = vpop.f32.mrf.mxu0
    %v495 = vadd.f32 0.0, %v494
    %v496 = vpop.f32.mrf.mxu0
    %v497 = vadd.f32 0.0, %v496
    %498 = vmatprep.mubr.bf16.mxu0 0
    %499 = vmatmul.mubr.bf16.gmra.mxu0 %v99
    %v500 = vpop.f32.mrf.mxu0
    %v501 = vadd.f32 0.0, %v500
    %v502 = vpop.f32.mrf.mxu0
    %v503 = vadd.f32 0.0, %v502
    %v504 = vpop.f32.mrf.mxu0
    %v505 = vadd.f32 0.0, %v504
    %v506 = vpop.f32.mrf.mxu0
    %v507 = vadd.f32 0.0, %v506
    %508 = vmatprep.mubr.bf16.mxu0 0
    %509 = vmatmul.mubr.bf16.gmra.mxu0 %v100
    %v510 = vpop.f32.mrf.mxu0
    %v511 = vadd.f32 0.0, %v510
    %v512 = vpop.f32.mrf.mxu0
    %v513 = vadd.f32 0.0, %v512
    %v514 = vpop.f32.mrf.mxu0
    %v515 = vadd.f32 0.0, %v514
    %v516 = vpop.f32.mrf.mxu0
    %v517 = vadd.f32 0.0, %v516
    %518 = vdwg.mxu0
    %v519 = vxor.u32 %v328, 2147483648
    %v520 = vxor.u32 %v330, 2147483648
    %v521 = vxor.u32 %v332, 2147483648
    %v522 = vxor.u32 %v334, 2147483648
    %v523 = vxor.u32 %v338, 2147483648
    %v524 = vxor.u32 %v340, 2147483648
    %v525 = vxor.u32 %v342, 2147483648
    %v526 = vxor.u32 %v344, 2147483648
    %v527 = vxor.u32 %v348, 2147483648
    %v528 = vxor.u32 %v350, 2147483648
    %v529 = vxor.u32 %v352, 2147483648
    %v530 = vxor.u32 %v354, 2147483648
    %v531 = vxor.u32 %v358, 2147483648
    %v532 = vxor.u32 %v360, 2147483648
    %v533 = vxor.u32 %v362, 2147483648
    %v534 = vxor.u32 %v364, 2147483648
    %v535 = vxor.u32 %v368, 2147483648
    %v536 = vxor.u32 %v370, 2147483648
    %v537 = vxor.u32 %v372, 2147483648
    %v538 = vxor.u32 %v374, 2147483648
    %v539 = vxor.u32 %v378, 2147483648
    %v540 = vxor.u32 %v380, 2147483648
    %v541 = vxor.u32 %v382, 2147483648
    %v542 = vxor.u32 %v384, 2147483648
    %v543 = vxor.u32 %v388, 2147483648
    %v544 = vxor.u32 %v390, 2147483648
    %v545 = vxor.u32 %v392, 2147483648
    %v546 = vxor.u32 %v394, 2147483648
    %v547 = vxor.u32 %v398, 2147483648
    %v548 = vxor.u32 %v400, 2147483648
    %v549 = vxor.u32 %v402, 2147483648
    %v550 = vxor.u32 %v404, 2147483648
    %v551 = vmul.f32 %v519, 1.442695
    %v552 = vpow.pop %v551
    %v553 = vmul.f32 %v520, 1.442695
    %v554 = vpow.pop %v553
    %v555 = vmul.f32 %v521, 1.442695
    %v556 = vpow.pop %v555
    %v557 = vmul.f32 %v522, 1.442695
    %v558 = vpow.pop %v557
    %v559 = vmul.f32 %v523, 1.442695
    %v560 = vpow.pop %v559
    %v561 = vmul.f32 %v524, 1.442695
    %v562 = vpow.pop %v561
    %v563 = vmul.f32 %v525, 1.442695
    %v564 = vpow.pop %v563
    %v565 = vmul.f32 %v526, 1.442695
    %v566 = vpow.pop %v565
    %v567 = vmul.f32 %v527, 1.442695
    %v568 = vpow.pop %v567
    %v569 = vmul.f32 %v528, 1.442695
    %v570 = vpow.pop %v569
    %v571 = vmul.f32 %v529, 1.442695
    %v572 = vpow.pop %v571
    %v573 = vmul.f32 %v530, 1.442695
    %v574 = vpow.pop %v573
    %v575 = vmul.f32 %v531, 1.442695
    %v576 = vpow.pop %v575
    %v577 = vmul.f32 %v532, 1.442695
    %v578 = vpow.pop %v577
    %v579 = vmul.f32 %v533, 1.442695
    %v580 = vpow.pop %v579
    %v581 = vmul.f32 %v534, 1.442695
    %v582 = vpow.pop %v581
    %v583 = vmul.f32 %v535, 1.442695
    %v584 = vpow.pop %v583
    %v585 = vmul.f32 %v536, 1.442695
    %v586 = vpow.pop %v585
    %v587 = vmul.f32 %v537, 1.442695
    %v588 = vpow.pop %v587
    %v589 = vmul.f32 %v538, 1.442695
    %v590 = vpow.pop %v589
    %v591 = vmul.f32 %v539, 1.442695
    %v592 = vpow.pop %v591
    %v593 = vmul.f32 %v540, 1.442695
    %v594 = vpow.pop %v593
    %v595 = vmul.f32 %v541, 1.442695
    %v596 = vpow.pop %v595
    %v597 = vmul.f32 %v542, 1.442695
    %v598 = vpow.pop %v597
    %v599 = vmul.f32 %v543, 1.442695
    %v600 = vpow.pop %v599
    %v601 = vmul.f32 %v544, 1.442695
    %v602 = vpow.pop %v601
    %v603 = vmul.f32 %v545, 1.442695
    %v604 = vpow.pop %v603
    %v605 = vmul.f32 %v546, 1.442695
    %v606 = vpow.pop %v605
    %v607 = vmul.f32 %v547, 1.442695
    %v608 = vpow.pop %v607
    %v609 = vmul.f32 %v548, 1.442695
    %v610 = vpow.pop %v609
    %v611 = vmul.f32 %v549, 1.442695
    %v612 = vpow.pop %v611
    %v613 = vmul.f32 %v550, 1.442695
    %v614 = vpow.pop %v613
    %v615 = vadd.f32 %v552, 1.0
    %v616 = vadd.f32 %v554, 1.0
    %v617 = vadd.f32 %v556, 1.0
    %v618 = vadd.f32 %v558, 1.0
    %v619 = vadd.f32 %v560, 1.0
    %v620 = vadd.f32 %v562, 1.0
    %v621 = vadd.f32 %v564, 1.0
    %v622 = vadd.f32 %v566, 1.0
    %v623 = vadd.f32 %v568, 1.0
    %v624 = vadd.f32 %v570, 1.0
    %v625 = vadd.f32 %v572, 1.0
    %v626 = vadd.f32 %v574, 1.0
    %v627 = vadd.f32 %v576, 1.0
    %v628 = vadd.f32 %v578, 1.0
    %v629 = vadd.f32 %v580, 1.0
    %v630 = vadd.f32 %v582, 1.0
    %v631 = vadd.f32 %v584, 1.0
    %v632 = vadd.f32 %v586, 1.0
    %v633 = vadd.f32 %v588, 1.0
    %v634 = vadd.f32 %v590, 1.0
    %v635 = vadd.f32 %v592, 1.0
    %v636 = vadd.f32 %v594, 1.0
    %v637 = vadd.f32 %v596, 1.0
    %v638 = vadd.f32 %v598, 1.0
    %v639 = vadd.f32 %v600, 1.0
    %v640 = vadd.f32 %v602, 1.0
    %v641 = vadd.f32 %v604, 1.0
    %v642 = vadd.f32 %v606, 1.0
    %v643 = vadd.f32 %v608, 1.0
    %v644 = vadd.f32 %v610, 1.0
    %v645 = vadd.f32 %v612, 1.0
    %v646 = vadd.f32 %v614, 1.0
    %v647 = vrcp.pop %v615
    %v648 = vmul.f32 1.0, %v647
    %v649 = vrcp.pop %v616
    %v650 = vmul.f32 1.0, %v649
    %v651 = vrcp.pop %v617
    %v652 = vmul.f32 1.0, %v651
    %v653 = vrcp.pop %v618
    %v654 = vmul.f32 1.0, %v653
    %v655 = vrcp.pop %v619
    %v656 = vmul.f32 1.0, %v655
    %v657 = vrcp.pop %v620
    %v658 = vmul.f32 1.0, %v657
    %v659 = vrcp.pop %v621
    %v660 = vmul.f32 1.0, %v659
    %v661 = vrcp.pop %v622
    %v662 = vmul.f32 1.0, %v661
    %v663 = vrcp.pop %v623
    %v664 = vmul.f32 1.0, %v663
    %v665 = vrcp.pop %v624
    %v666 = vmul.f32 1.0, %v665
    %v667 = vrcp.pop %v625
    %v668 = vmul.f32 1.0, %v667
    %v669 = vrcp.pop %v626
    %v670 = vmul.f32 1.0, %v669
    %v671 = vrcp.pop %v627
    %v672 = vmul.f32 1.0, %v671
    %v673 = vrcp.pop %v628
    %v674 = vmul.f32 1.0, %v673
    %v675 = vrcp.pop %v629
    %v676 = vmul.f32 1.0, %v675
    %v677 = vrcp.pop %v630
    %v678 = vmul.f32 1.0, %v677
    %v679 = vrcp.pop %v631
    %v680 = vmul.f32 1.0, %v679
    %v681 = vrcp.pop %v632
    %v682 = vmul.f32 1.0, %v681
    %v683 = vrcp.pop %v633
    %v684 = vmul.f32 1.0, %v683
    %v685 = vrcp.pop %v634
    %v686 = vmul.f32 1.0, %v685
    %v687 = vrcp.pop %v635
    %v688 = vmul.f32 1.0, %v687
    %v689 = vrcp.pop %v636
    %v690 = vmul.f32 1.0, %v689
    %v691 = vrcp.pop %v637
    %v692 = vmul.f32 1.0, %v691
    %v693 = vrcp.pop %v638
    %v694 = vmul.f32 1.0, %v693
    %v695 = vrcp.pop %v639
    %v696 = vmul.f32 1.0, %v695
    %v697 = vrcp.pop %v640
    %v698 = vmul.f32 1.0, %v697
    %v699 = vrcp.pop %v641
    %v700 = vmul.f32 1.0, %v699
    %v701 = vrcp.pop %v642
    %v702 = vmul.f32 1.0, %v701
    %v703 = vrcp.pop %v643
    %v704 = vmul.f32 1.0, %v703
    %v705 = vrcp.pop %v644
    %v706 = vmul.f32 1.0, %v705
    %v707 = vrcp.pop %v645
    %v708 = vmul.f32 1.0, %v707
    %v709 = vrcp.pop %v646
    %v710 = vmul.f32 1.0, %v709
    %v711 = vmul.f32 %v328, %v648
    %v712 = vmul.f32 %v330, %v650
    %v713 = vmul.f32 %v332, %v652
    %v714 = vmul.f32 %v334, %v654
    %v715 = vmul.f32 %v338, %v656
    %v716 = vmul.f32 %v340, %v658
    %v717 = vmul.f32 %v342, %v660
    %v718 = vmul.f32 %v344, %v662
    %v719 = vmul.f32 %v348, %v664
    %v720 = vmul.f32 %v350, %v666
    %v721 = vmul.f32 %v352, %v668
    %v722 = vmul.f32 %v354, %v670
    %v723 = vmul.f32 %v358, %v672
    %v724 = vmul.f32 %v360, %v674
    %v725 = vmul.f32 %v362, %v676
    %v726 = vmul.f32 %v364, %v678
    %v727 = vmul.f32 %v368, %v680
    %v728 = vmul.f32 %v370, %v682
    %v729 = vmul.f32 %v372, %v684
    %v730 = vmul.f32 %v374, %v686
    %v731 = vmul.f32 %v378, %v688
    %v732 = vmul.f32 %v380, %v690
    %v733 = vmul.f32 %v382, %v692
    %v734 = vmul.f32 %v384, %v694
    %v735 = vmul.f32 %v388, %v696
    %v736 = vmul.f32 %v390, %v698
    %v737 = vmul.f32 %v392, %v700
    %v738 = vmul.f32 %v394, %v702
    %v739 = vmul.f32 %v398, %v704
    %v740 = vmul.f32 %v400, %v706
    %v741 = vmul.f32 %v402, %v708
    %v742 = vmul.f32 %v404, %v710
    %v743 = vmul.f32 %v711, %v441
    %v744 = vmul.f32 %v712, %v443
    %v745 = vmul.f32 %v713, %v445
    %v746 = vmul.f32 %v714, %v447
    %v747 = vmul.f32 %v715, %v451
    %v748 = vmul.f32 %v716, %v453
    %v749 = vmul.f32 %v717, %v455
    %v750 = vmul.f32 %v718, %v457
    %v751 = vmul.f32 %v719, %v461
    %v752 = vmul.f32 %v720, %v463
    %v753 = vmul.f32 %v721, %v465
    %v754 = vmul.f32 %v722, %v467
    %v755 = vmul.f32 %v723, %v471
    %v756 = vmul.f32 %v724, %v473
    %v757 = vmul.f32 %v725, %v475
    %v758 = vmul.f32 %v726, %v477
    %v759 = vmul.f32 %v727, %v481
    %v760 = vmul.f32 %v728, %v483
    %v761 = vmul.f32 %v729, %v485
    %v762 = vmul.f32 %v730, %v487
    %v763 = vmul.f32 %v731, %v491
    %v764 = vmul.f32 %v732, %v493
    %v765 = vmul.f32 %v733, %v495
    %v766 = vmul.f32 %v734, %v497
    %v767 = vmul.f32 %v735, %v501
    %v768 = vmul.f32 %v736, %v503
    %v769 = vmul.f32 %v737, %v505
    %v770 = vmul.f32 %v738, %v507
    %v771 = vmul.f32 %v739, %v511
    %v772 = vmul.f32 %v740, %v513
    %v773 = vmul.f32 %v741, %v515
    %v774 = vmul.f32 %v742, %v517
    %v775 = vld [vmem:[#allocation2] sm:$0xff]
    %v776 = vld [vmem:[#allocation2 + $0x8] sm:$0xff]
    %v777 = vld [vmem:[#allocation2 + $0x10] sm:$0xff]
    %v778 = vld [vmem:[#allocation2 + $0x18] sm:$0xff]
    %v779 = vld [vmem:[#allocation2 + $0x20] sm:$0xff]
    %v780 = vld [vmem:[#allocation2 + $0x28] sm:$0xff]
    %v781 = vld [vmem:[#allocation2 + $0x30] sm:$0xff]
    %v782 = vld [vmem:[#allocation2 + $0x38] sm:$0xff]
    %v783 = vld [vmem:[#allocation2 + $0x40] sm:$0xff]
    %v784 = vld [vmem:[#allocation2 + $0x48] sm:$0xff]
    %v785 = vld [vmem:[#allocation2 + $0x50] sm:$0xff]
    %v786 = vld [vmem:[#allocation2 + $0x58] sm:$0xff]
    %v787 = vld [vmem:[#allocation2 + $0x60] sm:$0xff]
    %v788 = vld [vmem:[#allocation2 + $0x68] sm:$0xff]
    %v789 = vld [vmem:[#allocation2 + $0x70] sm:$0xff]
    %v790 = vld [vmem:[#allocation2 + $0x78] sm:$0xff]
    %v791 = vpack.c.bf16 %v745, %v743
    %v792 = vpack.c.bf16 %v746, %v744
    %v793 = vpack.c.bf16 %v749, %v747
    %v794 = vpack.c.bf16 %v750, %v748
    %v795 = vpack.c.bf16 %v753, %v751
    %v796 = vpack.c.bf16 %v754, %v752
    %v797 = vpack.c.bf16 %v757, %v755
    %v798 = vpack.c.bf16 %v758, %v756
    %v799 = vpack.c.bf16 %v761, %v759
    %v800 = vpack.c.bf16 %v762, %v760
    %v801 = vpack.c.bf16 %v765, %v763
    %v802 = vpack.c.bf16 %v766, %v764
    %v803 = vpack.c.bf16 %v769, %v767
    %v804 = vpack.c.bf16 %v770, %v768
    %v805 = vpack.c.bf16 %v773, %v771
    %v806 = vpack.c.bf16 %v774, %v772
    %v807 = vld [vmem:[#allocation8] sm:$0xf]
    %v808 = vld [vmem:[#allocation8 + $0x4] sm:$0xf]
    %v809 = vld [vmem:[#allocation8 + $0x8] sm:$0xf]
    %v810 = vld [vmem:[#allocation8 + $0xc] sm:$0xf]
    %v811 = vld [vmem:[#allocation8 + $0x10] sm:$0xf]
    %v812 = vld [vmem:[#allocation8 + $0x14] sm:$0xf]
    %v813 = vld [vmem:[#allocation8 + $0x18] sm:$0xf]
    %v814 = vld [vmem:[#allocation8 + $0x1c] sm:$0xf]
    %v815 = vld [vmem:[#allocation8 + $0x20] sm:$0xf]
    %v816 = vld [vmem:[#allocation8 + $0x24] sm:$0xf]
    %v817 = vld [vmem:[#allocation8 + $0x28] sm:$0xf]
    %v818 = vld [vmem:[#allocation8 + $0x2c] sm:$0xf]
    %v819 = vld [vmem:[#allocation8 + $0x30] sm:$0xf]
    %v820 = vld [vmem:[#allocation8 + $0x34] sm:$0xf]
    %v821 = vld [vmem:[#allocation8 + $0x38] sm:$0xf]
    %v822 = vld [vmem:[#allocation8 + $0x3c] sm:$0xf]
    %v823 = vld [vmem:[#allocation8 + $0x40] sm:$0xf]
    %v824 = vld [vmem:[#allocation8 + $0x44] sm:$0xf]
    %v825 = vld [vmem:[#allocation8 + $0x48] sm:$0xf]
    %v826 = vld [vmem:[#allocation8 + $0x4c] sm:$0xf]
    %v827 = vld [vmem:[#allocation8 + $0x50] sm:$0xf]
    %v828 = vld [vmem:[#allocation8 + $0x54] sm:$0xf]
    %v829 = vld [vmem:[#allocation8 + $0x58] sm:$0xf]
    %v830 = vld [vmem:[#allocation8 + $0x5c] sm:$0xf]
    %v831 = vld [vmem:[#allocation8 + $0x60] sm:$0xf]
    %v832 = vld [vmem:[#allocation8 + $0x64] sm:$0xf]
    %v833 = vld [vmem:[#allocation8 + $0x68] sm:$0xf]
    %v834 = vld [vmem:[#allocation8 + $0x6c] sm:$0xf]
    %v835 = vld [vmem:[#allocation8 + $0x70] sm:$0xf]
    %v836 = vld [vmem:[#allocation8 + $0x74] sm:$0xf]
    %v837 = vld [vmem:[#allocation8 + $0x78] sm:$0xf]
    %v838 = vld [vmem:[#allocation8 + $0x7c] sm:$0xf]
    %v871 = vunpack.c.l.b16 %v807
    %v872 = vunpack.c.l.b16 %v808
    %v873 = vunpack.c.l.b16 %v809
    %v874 = vunpack.c.l.b16 %v810
    %v875 = vunpack.c.l.b16 %v811
    %v876 = vunpack.c.l.b16 %v812
    %v877 = vunpack.c.l.b16 %v813
    %v878 = vunpack.c.l.b16 %v814
    %v879 = vunpack.c.l.b16 %v815
    %v880 = vunpack.c.l.b16 %v816
    %v881 = vunpack.c.l.b16 %v817
    %v882 = vunpack.c.l.b16 %v818
    %v883 = vunpack.c.l.b16 %v819
    %v884 = vunpack.c.l.b16 %v820
    %v885 = vunpack.c.l.b16 %v821
    %v886 = vunpack.c.l.b16 %v822
    %v887 = vunpack.c.l.b16 %v823
    %v888 = vunpack.c.l.b16 %v824
    %v889 = vunpack.c.l.b16 %v825
    %v890 = vunpack.c.l.b16 %v826
    %v891 = vunpack.c.l.b16 %v827
    %v892 = vunpack.c.l.b16 %v828
    %v893 = vunpack.c.l.b16 %v829
    %v894 = vunpack.c.l.b16 %v830
    %v895 = vunpack.c.l.b16 %v831
    %v896 = vunpack.c.l.b16 %v832
    %v897 = vunpack.c.l.b16 %v833
    %v898 = vunpack.c.l.b16 %v834
    %v899 = vunpack.c.l.b16 %v835
    %v900 = vunpack.c.l.b16 %v836
    %v901 = vunpack.c.l.b16 %v837
    %v902 = vunpack.c.l.b16 %v838
    %v903 = vpack.c.b16 %v872, %v871
    %v904 = vpack.c.b16 %v874, %v873
    %v905 = vpack.c.b16 %v876, %v875
    %v906 = vpack.c.b16 %v878, %v877
    %v907 = vpack.c.b16 %v880, %v879
    %v908 = vpack.c.b16 %v882, %v881
    %v909 = vpack.c.b16 %v884, %v883
    %v910 = vpack.c.b16 %v886, %v885
    %v911 = vpack.c.b16 %v888, %v887
    %v912 = vpack.c.b16 %v890, %v889
    %v913 = vpack.c.b16 %v892, %v891
    %v914 = vpack.c.b16 %v894, %v893
    %v915 = vpack.c.b16 %v896, %v895
    %v916 = vpack.c.b16 %v898, %v897
    %v917 = vpack.c.b16 %v900, %v899
    %v918 = vpack.c.b16 %v902, %v901
    %935 = vmatprep.subr.bf16.mxu0 0
    %936 = vmatpush1.bf16.msra.mxu0 %v910
    %937 = vmatprep.subr.bf16.mxu0 0
    %938 = vmatpush1.bf16.msra.mxu0 %v909
    %939 = vmatprep.subr.bf16.mxu0 0
    %940 = vmatpush1.bf16.msra.mxu0 %v908
    %941 = vmatprep.subr.bf16.mxu0 0
    %942 = vmatpush1.bf16.msra.mxu0 %v907
    %943 = vmatprep.subr.bf16.mxu0 0
    %944 = vmatpush1.bf16.msra.mxu0 %v906
    %945 = vmatprep.subr.bf16.mxu0 0
    %946 = vmatpush1.bf16.msra.mxu0 %v905
    %947 = vmatprep.subr.bf16.mxu0 0
    %948 = vmatpush1.bf16.msra.mxu0 %v904
    %949 = vmatprep.subr.bf16.mxu0 0
    %950 = vmatpush1.bf16.msra.mxu0 %v903
    %951 = vmatprep.subr.bf16.mxu0 0
    %952 = vmatpush2.bf16.msra.mxu0 %v918
    %953 = vmatprep.subr.bf16.mxu0 0
    %954 = vmatpush2.bf16.msra.mxu0 %v917
    %955 = vmatprep.subr.bf16.mxu0 0
    %956 = vmatpush2.bf16.msra.mxu0 %v916
    %957 = vmatprep.subr.bf16.mxu0 0
    %958 = vmatpush2.bf16.msra.mxu0 %v915
    %959 = vmatprep.subr.bf16.mxu0 0
    %960 = vmatpush2.bf16.msra.mxu0 %v914
    %961 = vmatprep.subr.bf16.mxu0 0
    %962 = vmatpush2.bf16.msra.mxu0 %v913
    %963 = vmatprep.subr.bf16.mxu0 0
    %964 = vmatpush2.bf16.msra.mxu0 %v912
    %965 = vmatprep.subr.bf16.mxu0 0
    %966 = vmatpush2.bf16.msra.mxu0 %v911
    %967 = vmatprep.mubr.bf16.mxu0 %v792
    %968 = vmatmul.mubr.bf16.gmra.mxu0 %v791
    %v969 = vpop.f32.mrf.mxu0
    %v970 = vadd.f32 0.0, %v969
    %v971 = vpop.f32.mrf.mxu0
    %v972 = vpop.f32.mrf.mxu0
    %v973 = vadd.f32 0.0, %v972
    %v974 = vpop.f32.mrf.mxu0
    %975 = vmatprep.mubr.bf16.mxu0 %v794
    %976 = vmatmul.mubr.bf16.gmra.mxu0 %v793
    %v977 = vpop.f32.mrf.mxu0
    %v978 = vadd.f32 0.0, %v977
    %v979 = vpop.f32.mrf.mxu0
    %v980 = vpop.f32.mrf.mxu0
    %v981 = vadd.f32 0.0, %v980
    %v982 = vpop.f32.mrf.mxu0
    %983 = vmatprep.mubr.bf16.mxu0 %v796
    %984 = vmatmul.mubr.bf16.gmra.mxu0 %v795
    %v985 = vpop.f32.mrf.mxu0
    %v986 = vadd.f32 0.0, %v985
    %v987 = vpop.f32.mrf.mxu0
    %v988 = vpop.f32.mrf.mxu0
    %v989 = vadd.f32 0.0, %v988
    %v990 = vpop.f32.mrf.mxu0
    %991 = vmatprep.mubr.bf16.mxu0 %v798
    %992 = vmatmul.mubr.bf16.gmra.mxu0 %v797
    %v993 = vpop.f32.mrf.mxu0
    %v994 = vadd.f32 0.0, %v993
    %v995 = vpop.f32.mrf.mxu0
    %v996 = vpop.f32.mrf.mxu0
    %v997 = vadd.f32 0.0, %v996
    %v998 = vpop.f32.mrf.mxu0
    %999 = vmatprep.mubr.bf16.mxu0 %v800
    %1000 = vmatmul.mubr.bf16.gmra.mxu0 %v799
    %v1001 = vpop.f32.mrf.mxu0
    %v1002 = vadd.f32 0.0, %v1001
    %v1003 = vpop.f32.mrf.mxu0
    %v1004 = vpop.f32.mrf.mxu0
    %v1005 = vadd.f32 0.0, %v1004
    %v1006 = vpop.f32.mrf.mxu0
    %1007 = vmatprep.mubr.bf16.mxu0 %v802
    %1008 = vmatmul.mubr.bf16.gmra.mxu0 %v801
    %v1009 = vpop.f32.mrf.mxu0
    %v1010 = vadd.f32 0.0, %v1009
    %v1011 = vpop.f32.mrf.mxu0
    %v1012 = vpop.f32.mrf.mxu0
    %v1013 = vadd.f32 0.0, %v1012
    %v1014 = vpop.f32.mrf.mxu0
    %1015 = vmatprep.mubr.bf16.mxu0 %v804
    %1016 = vmatmul.mubr.bf16.gmra.mxu0 %v803
    %v1017 = vpop.f32.mrf.mxu0
    %v1018 = vadd.f32 0.0, %v1017
    %v1019 = vpop.f32.mrf.mxu0
    %v1020 = vpop.f32.mrf.mxu0
    %v1021 = vadd.f32 0.0, %v1020
    %v1022 = vpop.f32.mrf.mxu0
    %1023 = vmatprep.mubr.bf16.mxu0 %v806
    %1024 = vmatmul.mubr.bf16.gmra.mxu0 %v805
    %v1025 = vpop.f32.mrf.mxu0
    %v1026 = vadd.f32 0.0, %v1025
    %v1027 = vpop.f32.mrf.mxu0
    %v1028 = vpop.f32.mrf.mxu0
    %v1029 = vadd.f32 0.0, %v1028
    %v1030 = vpop.f32.mrf.mxu0
    %1031 = vdwg.mxu0
    %v1032 = vadd.f32 %v775, %v970
    %v1033 = vadd.f32 %v776, %v973
    %v1034 = vadd.f32 %v777, %v978
    %v1035 = vadd.f32 %v778, %v981
    %v1036 = vadd.f32 %v779, %v986
    %v1037 = vadd.f32 %v780, %v989
    %v1038 = vadd.f32 %v781, %v994
    %v1039 = vadd.f32 %v782, %v997
    %v1040 = vadd.f32 %v783, %v1002
    %v1041 = vadd.f32 %v784, %v1005
    %v1042 = vadd.f32 %v785, %v1010
    %v1043 = vadd.f32 %v786, %v1013
    %v1044 = vadd.f32 %v787, %v1018
    %v1045 = vadd.f32 %v788, %v1021
    %v1046 = vadd.f32 %v789, %v1026
    %v1047 = vadd.f32 %v790, %v1029
    %1048 = vst [vmem:[#allocation2] sm:$0xff] %v1032
    %1049 = vst [vmem:[#allocation2 + $0x8] sm:$0xff] %v1033
    %1050 = vst [vmem:[#allocation2 + $0x10] sm:$0xff] %v1034
    %1051 = vst [vmem:[#allocation2 + $0x18] sm:$0xff] %v1035
    %1052 = vst [vmem:[#allocation2 + $0x20] sm:$0xff] %v1036
    %1053 = vst [vmem:[#allocation2 + $0x28] sm:$0xff] %v1037
    %1054 = vst [vmem:[#allocation2 + $0x30] sm:$0xff] %v1038
    %1055 = vst [vmem:[#allocation2 + $0x38] sm:$0xff] %v1039
    %1056 = vst [vmem:[#allocation2 + $0x40] sm:$0xff] %v1040
    %1057 = vst [vmem:[#allocation2 + $0x48] sm:$0xff] %v1041
    %1058 = vst [vmem:[#allocation2 + $0x50] sm:$0xff] %v1042
    %1059 = vst [vmem:[#allocation2 + $0x58] sm:$0xff] %v1043
    %1060 = vst [vmem:[#allocation2 + $0x60] sm:$0xff] %v1044
    %1061 = vst [vmem:[#allocation2 + $0x68] sm:$0xff] %v1045
    %1062 = vst [vmem:[#allocation2 + $0x70] sm:$0xff] %v1046
    %1063 = vst [vmem:[#allocation2 + $0x78] sm:$0xff] %v1047
    // Predicated region
    $region30: #{tpu_custom_call.1} parent=1 // pred_check
      %p1064 = pneg %p57
    $region31: #{tpu_custom_call.1} parent=1 // pred_check_branch
      %1066 = sbr.rel (%p1064) target = $region33
    $region32: #{tpu_custom_call.1} parent=1 // pred_region
      %v1067 = vld [vmem:[#allocation2] sm:$0xff]
      %v1068 = vld [vmem:[#allocation2 + $0x8] sm:$0xff]
      %v1069 = vld [vmem:[#allocation2 + $0x10] sm:$0xff]
      %v1070 = vld [vmem:[#allocation2 + $0x18] sm:$0xff]
      %v1071 = vld [vmem:[#allocation2 + $0x20] sm:$0xff]
      %v1072 = vld [vmem:[#allocation2 + $0x28] sm:$0xff]
      %v1073 = vld [vmem:[#allocation2 + $0x30] sm:$0xff]
      %v1074 = vld [vmem:[#allocation2 + $0x38] sm:$0xff]
      %v1075 = vld [vmem:[#allocation2 + $0x40] sm:$0xff]
      %v1076 = vld [vmem:[#allocation2 + $0x48] sm:$0xff]
      %v1077 = vld [vmem:[#allocation2 + $0x50] sm:$0xff]
      %v1078 = vld [vmem:[#allocation2 + $0x58] sm:$0xff]
      %v1079 = vld [vmem:[#allocation2 + $0x60] sm:$0xff]
      %v1080 = vld [vmem:[#allocation2 + $0x68] sm:$0xff]
      %v1081 = vld [vmem:[#allocation2 + $0x70] sm:$0xff]
      %v1082 = vld [vmem:[#allocation2 + $0x78] sm:$0xff]
      %1083 = vst [vmem:[#allocation9] sm:$0xff] %v1067
      %1084 = vst [vmem:[#allocation9 + $0x8] sm:$0xff] %v1068
      %1085 = vst [vmem:[#allocation9 + $0x10] sm:$0xff] %v1069
      %1086 = vst [vmem:[#allocation9 + $0x18] sm:$0xff] %v1070
      %1087 = vst [vmem:[#allocation9 + $0x20] sm:$0xff] %v1071
      %1088 = vst [vmem:[#allocation9 + $0x28] sm:$0xff] %v1072
      %1089 = vst [vmem:[#allocation9 + $0x30] sm:$0xff] %v1073
      %1090 = vst [vmem:[#allocation9 + $0x38] sm:$0xff] %v1074
      %1091 = vst [vmem:[#allocation9 + $0x40] sm:$0xff] %v1075
      %1092 = vst [vmem:[#allocation9 + $0x48] sm:$0xff] %v1076
      %1093 = vst [vmem:[#allocation9 + $0x50] sm:$0xff] %v1077
      %1094 = vst [vmem:[#allocation9 + $0x58] sm:$0xff] %v1078
      %1095 = vst [vmem:[#allocation9 + $0x60] sm:$0xff] %v1079
      %1096 = vst [vmem:[#allocation9 + $0x68] sm:$0xff] %v1080
      %1097 = vst [vmem:[#allocation9 + $0x70] sm:$0xff] %v1081
      %1098 = vst [vmem:[#allocation9 + $0x78] sm:$0xff] %v1082
    $region33: #{tpu_custom_call.1} parent=1 // pred_fallthru
      _
    // Predicated region
    $region34: #{tpu_custom_call.1} parent=1 // pred_check
      _
    $region35: #{tpu_custom_call.1} parent=1 // pred_check_branch
      %1100 = sbr.rel (0) target = $region37
    $region36: #{tpu_custom_call.1} parent=1 // pred_region
      %s1102 = ssub.s32 2048, 2048
      %1103 = vsyncadd [#allocation5], %s1102
      %s1104 = sshll.u32 [#allocation9], 4
      %s1105 = int_to_ptr.vmem [resolvable:$true] %s1104
      %1110 = dma.vmem_to_hbm [thread:$0]  %s1105, 2048, %s3, [#allocation5], 128, 128, 8
    $region37: #{tpu_custom_call.1} parent=1 // pred_fallthru
      _
    // Predicated region
    $region38: #{tpu_custom_call.1} parent=1 // pred_check
      _
    $region39: #{tpu_custom_call.1} parent=1 // pred_check_branch
      %1112 = sbr.rel (0) target = $region41
    $region40: #{tpu_custom_call.1} parent=1 // pred_region
      %1113 = dma.done [#allocation5], 2048
    $region41: #{tpu_custom_call.1} parent=1 // pred_fallthru
      _
    %1114 = vsyncpa [#allocation4], 1
    %1115 = vsyncpa [#allocation7], 1
    %1116 = vsyncpa [#allocation5], 1

</llo_original>
